<compile_context>
chip_gen: v5e
topology: v5e:2x2
jax: 0.10.0
libtpu: 0.0.40
codegen_flags: <defaults>
</compile_context>

<pallas_src>
import functools

import jax
import jax.numpy as jnp
from jax.experimental import pallas as pl
from jax.experimental.pallas import tpu as pltpu


# --------------------------------------------------------------------------
# Kernel: (tm, Kp) @ (Kp, E) -> + bias -> LayerNorm(E) -> (tm, E)
# --------------------------------------------------------------------------
def _patch_embed_ln_kernel(p_ref, w_ref, prm_ref, o_ref, *, eps, inv_e):
    # p_ref: (tm, Kp) patches tile; w_ref: (Kp, E) reshaped conv weight
    # prm_ref: (3, E) f32 [conv_bias; ln_gamma; ln_beta]; o_ref: (tm, E)
    acc = jnp.dot(p_ref[...], w_ref[...], preferred_element_type=jnp.float32)
    acc = acc + prm_ref[0:1, :]                       # conv bias (enters LN stats)
    # One-pass LN statistics: both XLU reductions read `acc` directly.
    s1 = jnp.sum(acc, axis=-1, keepdims=True) * inv_e
    s2 = jnp.sum(acc * acc, axis=-1, keepdims=True) * inv_e
    var = jnp.maximum(s2 - s1 * s1, 0.0)              # guard cancellation
    inv = jax.lax.rsqrt(var + eps)                    # EUP; LN math stays f32
    o_ref[...] = ((acc - s1) * inv * prm_ref[1:2, :]
                  + prm_ref[2:3, :]).astype(o_ref.dtype)


# --------------------------------------------------------------------------
# Helpers
# --------------------------------------------------------------------------
def _round_up(x, m):
    return (x + m - 1) // m * m


def _tpu_vmem_and_cores():
    """Best-effort hardware query; conservative (v7x-like) defaults on failure."""
    vmem_cap = 64 * 1024 * 1024
    cores = 1
    try:
        info = pltpu.get_tpu_info()
        vmem_cap = int(getattr(info, "vmem_capacity_bytes", vmem_cap))
        for name in ("num_tensorcores", "num_cores", "tensorcore_count"):
            v = getattr(info, name, None)
            if v:
                cores = int(v)
                break
    except Exception:
        pass
    return vmem_cap, max(cores, 1)


def _choose_row_tile(M, Kp, E, in_itemsize, out_itemsize, budget_bytes, target,
                     min_steps):
    """Largest power-of-two row tile <= target that fits the VMEM budget
    (including f32 epilogue temporaries), then shrunk so the single grid axis
    has >= min_steps steps (>= 2 per TensorCore for pipelining)."""
    def need(t):
        return (2 * t * Kp * in_itemsize        # patches tile, double-buffered
                + 2 * t * E * out_itemsize      # output tile, double-buffered
                + 2 * Kp * E * in_itemsize      # resident weight (worst case)
                + 8 * E * 4                     # packed params tile (padded)
                + 4 * t * E * 4)                # f32 acc / acc^2 / LN temporaries

    tm = target
    while tm > 8 and need(tm) > budget_bytes:
        tm //= 2
    while tm > 8 and pl.cdiv(M, tm) < min_steps:
        tm //= 2
    return max(tm, 8)


# --------------------------------------------------------------------------
# Wrapper
# --------------------------------------------------------------------------
def cltrf_forward(x, proj_w, proj_b, ln_g, ln_b, patch_size, *, eps=1e-5,
                  tm=None, compute_dtype=None):
    """x: (B, C, H, W) NCHW.  Returns (x_out (B, N, E), (H_p, W_p)).

    compute_dtype: optional MXU dtype for activations/weights (e.g. bf16 on
    v5e where the kernel is MXU-bound); default keeps x.dtype exactly.
    """
    B, C, H, W = x.shape
    ph, pw = patch_size
    assert H % ph == 0 and W % pw == 0
    Hp, Wp = H // ph, W // pw
    N = Hp * Wp
    E = proj_w.shape[0]
    K = C * ph * pw
    Kp = _round_up(K, 128)          # lane-dense contraction dim
    M = B * N
    out_dtype = x.dtype
    cd = jnp.dtype(x.dtype if compute_dtype is None else compute_dtype)

    # --- im2col (single layout pass; transpose + K-pad + cast fuse together;
    # allow_input_fusion lets XLA fold it into the Pallas input fetch) --------
    # TODO(synk): for very large images, move patch extraction fully in-kernel
    # (BlockSpec block (1, C, ph, W) on the NCHW input) to guarantee zero extra
    # HBM passes.
    patches = x.reshape(B, C, Hp, ph, Wp, pw)
    patches = jnp.transpose(patches, (0, 2, 4, 1, 3, 5)).reshape(M, K)
    if Kp != K:
        patches = jnp.pad(patches, ((0, 0), (0, Kp - K)))
    patches = patches.astype(cd)

    # Conv weight (E, C, ph, pw) -> (Kp, E), matching the activation dtype.
    w_mat = proj_w.reshape(E, K).T
    if Kp != K:
        w_mat = jnp.pad(w_mat, ((0, Kp - K), (0, 0)))
    w_mat = w_mat.astype(cd)

    # Pack bias / gamma / beta into one (3, E) f32 operand -> single DMA.
    params = jnp.stack([proj_b.astype(jnp.float32),
                        ln_g.astype(jnp.float32),
                        ln_b.astype(jnp.float32)], axis=0)

    # --- generation-aware tiling --------------------------------------------
    vmem_cap, cores = _tpu_vmem_and_cores()
    small_vmem = vmem_cap <= (64 << 20)               # v7x-class
    budget = (16 << 20) if small_vmem else (40 << 20)
    target = 512 if small_vmem else 1024
    min_steps = 2 * cores
    if tm is None:
        tm = _choose_row_tile(M, Kp, E, cd.itemsize,
                              jnp.dtype(out_dtype).itemsize, budget, target,
                              min_steps)
    grid = (pl.cdiv(M, tm),)        # ragged last block handled by Pallas masks

    # Constant-index weight is fetched once; drop its second pipeline buffer
    # when large to reclaim VMEM headroom (matters most on v7x's 64 MiB VMEM).
    w_bytes = Kp * E * w_mat.dtype.itemsize
    if w_bytes >= (1 << 20):
        w_spec = pl.BlockSpec((Kp, E), lambda i: (0, 0),
                              pipeline_mode=pl.Buffered(1))
        w_resident_bytes = w_bytes
    else:
        w_spec = pl.BlockSpec((Kp, E), lambda i: (0, 0))
        w_resident_bytes = 2 * w_bytes

    vmem_need = (2 * tm * Kp * cd.itemsize
                 + 2 * tm * E * jnp.dtype(out_dtype).itemsize
                 + w_resident_bytes
                 + 8 * E * 4
                 + 4 * tm * E * 4)                     # f32 epilogue temporaries
    vmem_cap_limit = max(32 << 20, int(vmem_cap * 0.6))
    vmem_limit = int(min(max(2 * vmem_need, 16 << 20), vmem_cap_limit))

    cost = pl.CostEstimate(
        flops=2 * M * Kp * E,
        transcendentals=M,                             # one rsqrt per row
        bytes_accessed=(M * Kp * cd.itemsize
                        + Kp * E * w_mat.dtype.itemsize
                        + 3 * E * 4
                        + M * E * jnp.dtype(out_dtype).itemsize))

    if cores >= 2:
        dim_sem = (pltpu.CORE_PARALLEL,)               # shard rows across TCs
    else:
        dim_sem = ("parallel",)

    kernel = functools.partial(_patch_embed_ln_kernel, eps=eps, inv_e=1.0 / E)

    out = pl.pallas_call(
        kernel,
        out_shape=jax.ShapeDtypeStruct((M, E), out_dtype),
        grid_spec=pltpu.PrefetchScalarGridSpec(
            num_scalar_prefetch=0,
            grid=grid,
            in_specs=[
                pl.BlockSpec((tm, Kp), lambda i: (i, 0)),   # patches tile
                w_spec,                                     # weight (resident)
                pl.BlockSpec((3, E), lambda i: (0, 0)),     # bias/gamma/beta
            ],
            # For production embed dims (E % 128 == 0) this output block is
            # lane-dense and lowers to unmasked `vst`.
            out_specs=pl.BlockSpec((tm, E), lambda i: (i, 0)),
        ),
        compiler_params=pltpu.CompilerParams(
            dimension_semantics=dim_sem,
            vmem_limit_bytes=vmem_limit,
            allow_input_fusion=[True, True, False],
        ),
        cost_estimate=cost,
    )(patches, w_mat, params)

    return out.reshape(B, N, E), (Hp, Wp)


# --------------------------------------------------------------------------
# Pure-JAX reference (PyTorch semantics)
# --------------------------------------------------------------------------
def _reference(x, proj_w, proj_b, ln_g, ln_b, patch_size, eps=1e-5):
    ph, pw = patch_size
    y = jax.lax.conv_general_dilated(
        x, proj_w, window_strides=(ph, pw), padding="VALID",
        dimension_numbers=("NCHW", "OIHW", "NCHW"))
    y = y + proj_b[None, :, None, None]
    B_, E, Hp, Wp = y.shape
    y = y.reshape(B_, E, Hp * Wp).transpose(0, 2, 1)            # (B, N, E)
    mean = jnp.mean(y, axis=-1, keepdims=True)
    var = jnp.mean((y - mean) ** 2, axis=-1, keepdims=True)
    y = (y - mean) / jnp.sqrt(var + eps)
    y = y * ln_g + ln_b
    return y, (Hp, Wp)


if __name__ == "__main__":
    # Small shapes consistent with the module: img=16, patch=4, C=3, E=32.
    B, C = 2, 3
    img_size, patch = 16, 4
    embed_dim = 32

    key = jax.random.PRNGKey(0)
    k_x, k_w, k_b, k_g, k_be = jax.random.split(key, 5)

    x = jax.random.normal(k_x, (B, C, img_size, img_size), dtype=jnp.float32)
    proj_w = jax.random.normal(k_w, (embed_dim, C, patch, patch),
                               dtype=jnp.float32) * 0.02
    proj_b = jax.random.normal(k_b, (embed_dim,), dtype=jnp.float32) * 0.02
    ln_g = jnp.ones((embed_dim,), dtype=jnp.float32)
    ln_b = jnp.zeros((embed_dim,), dtype=jnp.float32)

    fwd = jax.jit(cltrf_forward, static_argnums=(5,))
    out, (Hp, Wp) = fwd(x, proj_w, proj_b, ln_g, ln_b, (patch, patch))
    out = jax.block_until_ready(out)
    Hp, Wp = int(Hp), int(Wp)

    ref, (Hr, Wr) = _reference(x, proj_w, proj_b, ln_g, ln_b, (patch, patch))
    assert out.shape == (B, (img_size // patch) ** 2, embed_dim)
    assert (Hp, Wp) == (Hr, Wr) == (img_size // patch, img_size // patch)
    assert jnp.allclose(out, ref, atol=1e-4, rtol=1e-4), (
        float(jnp.max(jnp.abs(out - ref))))

    print("KERNEL_OK")
</pallas_src>

<mosaic_0001>
module attributes {stable_mosaic.version = 11 : i64} {
  func.func @_patch_embed_ln_kernel(%arg0: i32, %arg1: memref<16x128xf32, #tpu.memory_space<vmem>>, %arg2: memref<128x32xf32, #tpu.memory_space<vmem>>, %arg3: memref<3x32xf32, #tpu.memory_space<vmem>>, %arg4: memref<16x32xf32, #tpu.memory_space<vmem>>) attributes {dimension_semantics = [#tpu.dimension_semantics<parallel>], iteration_bounds = array<i64: 2>, scalar_prefetch = 0 : i64, scratch_operands = 0 : i64, tpu.core_type = #tpu.core_type<tc>, window_params = [{transform_indices = @transform_0, window_bounds = array<i64: 16, 128>}, {pipeline_mode = #tpu.pipeline_mode<synchronous>, transform_indices = @transform_1, window_bounds = array<i64: 128, 32>}, {pipeline_mode = #tpu.pipeline_mode<synchronous>, transform_indices = @transform_2, window_bounds = array<i64: 3, 32>}, {transform_indices = @transform_3, window_bounds = array<i64: 16, 32>}]} {
    %c0 = arith.constant 0 : index
    %c0_0 = arith.constant 0 : index
    %0 = vector.load %arg1[%c0, %c0_0] : memref<16x128xf32, #tpu.memory_space<vmem>>, vector<16x128xf32>
    %c0_1 = arith.constant 0 : index
    %c0_2 = arith.constant 0 : index
    %1 = vector.load %arg2[%c0_1, %c0_2] : memref<128x32xf32, #tpu.memory_space<vmem>>, vector<128x32xf32>
    %cst = arith.constant dense<0.000000e+00> : vector<16x32xf32>
    %2 = tpu.matmul %0, %1, %cst {dimension_numbers = #tpu.dot_dimension_numbers<[1], [0], [0], [1], [0, 0, 1, 1], [], []>} : vector<16x128xf32>, vector<128x32xf32>, vector<16x32xf32> -> vector<16x32xf32>
    %c0_3 = arith.constant 0 : index
    %c0_4 = arith.constant 0 : index
    %3 = vector.load %arg3[%c0_3, %c0_4] : memref<3x32xf32, #tpu.memory_space<vmem>>, vector<1x32xf32>
    %4 = vector.broadcast %3 : vector<1x32xf32> to vector<16x32xf32>
    %5 = arith.addf %2, %4 : vector<16x32xf32>
    %cst_5 = arith.constant dense<0.000000e+00> : vector<16xf32>
    %6 = vector.multi_reduction <add>, %5, %cst_5 [1] : vector<16x32xf32> to vector<16xf32>
    %7 = vector.shape_cast %6 : vector<16xf32> to vector<16x1xf32>
    %cst_6 = arith.constant 3.125000e-02 : f32
    %8 = vector.broadcast %cst_6 : f32 to vector<16x1xf32>
    %9 = arith.mulf %7, %8 : vector<16x1xf32>
    %10 = arith.mulf %5, %5 : vector<16x32xf32>
    %cst_7 = arith.constant dense<0.000000e+00> : vector<16xf32>
    %11 = vector.multi_reduction <add>, %10, %cst_7 [1] : vector<16x32xf32> to vector<16xf32>
    %12 = vector.shape_cast %11 : vector<16xf32> to vector<16x1xf32>
    %cst_8 = arith.constant 3.125000e-02 : f32
    %13 = vector.broadcast %cst_8 : f32 to vector<16x1xf32>
    %14 = arith.mulf %12, %13 : vector<16x1xf32>
    %15 = arith.mulf %9, %9 : vector<16x1xf32>
    %16 = arith.subf %14, %15 : vector<16x1xf32>
    %cst_9 = arith.constant 0.000000e+00 : f32
    %17 = vector.broadcast %cst_9 : f32 to vector<16x1xf32>
    %18 = arith.maximumf %16, %17 : vector<16x1xf32>
    %cst_10 = arith.constant 9.99999974E-6 : f32
    %19 = vector.broadcast %cst_10 : f32 to vector<16x1xf32>
    %20 = arith.addf %18, %19 : vector<16x1xf32>
    %21 = math.rsqrt %20 : vector<16x1xf32>
    %22 = vector.broadcast %9 : vector<16x1xf32> to vector<16x32xf32>
    %23 = arith.subf %5, %22 : vector<16x32xf32>
    %24 = vector.broadcast %21 : vector<16x1xf32> to vector<16x32xf32>
    %25 = arith.mulf %23, %24 : vector<16x32xf32>
    %c1 = arith.constant 1 : index
    %c0_11 = arith.constant 0 : index
    %26 = vector.load %arg3[%c1, %c0_11] : memref<3x32xf32, #tpu.memory_space<vmem>>, vector<1x32xf32>
    %27 = vector.broadcast %26 : vector<1x32xf32> to vector<16x32xf32>
    %28 = arith.mulf %25, %27 : vector<16x32xf32>
    %c2 = arith.constant 2 : index
    %c0_12 = arith.constant 0 : index
    %29 = vector.load %arg3[%c2, %c0_12] : memref<3x32xf32, #tpu.memory_space<vmem>>, vector<1x32xf32>
    %30 = vector.broadcast %29 : vector<1x32xf32> to vector<16x32xf32>
    %31 = arith.addf %28, %30 : vector<16x32xf32>
    %c0_13 = arith.constant 0 : index
    %c0_14 = arith.constant 0 : index
    %32 = vector.load %arg4[%c0_13, %c0_14] : memref<16x32xf32, #tpu.memory_space<vmem>>, vector<16x32xf32>
    tpu.vector_store %arg4[%c0_13, %c0_14], %31 {strides = array<i32>} : memref<16x32xf32, #tpu.memory_space<vmem>>, vector<16x32xf32>,
    return
  }
  func.func @transform_0(%arg0: i32) -> (i32, i32) {
    %c0_i32 = arith.constant 0 : i32
    %c0_i32_0 = arith.constant 0 : i32
    return %arg0, %c0_i32 : i32, i32
  }
  func.func @transform_1(%arg0: i32) -> (i32, i32) {
    %c0_i32 = arith.constant 0 : i32
    %c0_i32_0 = arith.constant 0 : i32
    %c0_i32_1 = arith.constant 0 : i32
    return %c0_i32, %c0_i32_0 : i32, i32
  }
  func.func @transform_2(%arg0: i32) -> (i32, i32) {
    %c0_i32 = arith.constant 0 : i32
    %c0_i32_0 = arith.constant 0 : i32
    %c0_i32_1 = arith.constant 0 : i32
    return %c0_i32, %c0_i32_0 : i32, i32
  }
  func.func @transform_3(%arg0: i32) -> (i32, i32) {
    %c0_i32 = arith.constant 0 : i32
    %c0_i32_0 = arith.constant 0 : i32
    return %arg0, %c0_i32 : i32, i32
  }
}

</mosaic_0001>

<llo_original>
// kernel: cltrf_forward.2
$region0: #{cltrf_forward.2}
  #allocation0 [shape = 'u32[]', space=smem, size = 0x4, offset = 0x4, fixed_abs, tag = 'smem constant byte address 0x4 - core index']
  #allocation1 [shape = 'u32[72,128]{1,0:T(1,128)}', space=vmem, size = 0x9000, scoped, tag = 'internal scratch']
  #allocation2 [shape = 'u32[2048]{0}', space=vmem, size = 0x2000, scoped, tag = 'scoped memory for cltrf_forward.2']
  #allocation3 [shape = 'u32[2048]{0}', space=vmem, size = 0x2000, scoped, tag = 'scoped memory for cltrf_forward.2']
  #allocation4 [shape = 'u32[2048]{0}', space=vmem, size = 0x2000, scoped, tag = 'scoped memory for cltrf_forward.2']
  #allocation5 [shape = 'u32[2048]{0}', space=vmem, size = 0x2000, scoped, tag = 'scoped memory for cltrf_forward.2']
  #allocation6 [shape = 'u32[2048]{0}', space=vmem, size = 0x2000, scoped, tag = 'scoped memory for cltrf_forward.2']
  #allocation7 [shape = 'u32[2048]{0}', space=vmem, size = 0x2000, scoped, tag = 'scoped memory for cltrf_forward.2']
  #allocation8 [shape = 'u32[2048]{0}', space=vmem, size = 0x2000, scoped, tag = 'scoped memory for cltrf_forward.2']
  #allocation9 [shape = 'u32[2048]{0}', space=vmem, size = 0x2000, scoped, tag = 'scoped memory for cltrf_forward.2']
  #allocation10 [shape = 'u32[2048]{0}', space=vmem, size = 0x2000, scoped, tag = 'scoped memory for cltrf_forward.2']
  #allocation11 [shape = 'u32[2048]{0}', space=vmem, size = 0x2000, scoped, tag = 'scoped memory for cltrf_forward.2']
  %s0 = inlined_call_operand.vmem [shape: f32[3,32], index: 0, kind: input, shape index: {}]
  %s1 = inlined_call_operand.vmem [shape: f32[48,32], index: 1, kind: input, shape index: {}]
  %s2 = inlined_call_operand.<no memory space> [shape: f32[], index: 2, kind: input, shape index: {}]
  %s3 = inlined_call_operand.vmem [shape: f32[32,48], index: 3, kind: input, shape index: {}]
  %s4 = inlined_call_operand.hbm [shape: f32[32,32], index: 4, kind: output, shape index: {}]
  %s5 = sld [smem:[#allocation0]]
  $region45: #{cltrf_forward.2} parent=0
    _
  %s7 = ssub.s32 1, %s5
  %s8 = scalar_select 0, %s7, %s5
  %v9 = vstv %s2
  %v10 = vstv %s2
  $region1: #{cltrf_forward.2} parent=0
    #allocation12 [shape = 'u8[16384]{0}', space=vmem, size = 0x4000, scoped, tag = 'output window, operand 0']
    #allocation13 [shape = 's32[2]{0}', space=sflag, size = 0x8, scoped, tag = 'scoped memory for cltrf_forward.2']
    %11 = vsyncpa [#allocation13], 0
    %s12 = scalar_lea.sflag [#allocation13], 1
    %13 = vsyncpa %s12, 0
    loop: start=0, step=1, limit=4
    $region2: #{cltrf_forward.2} parent=1 // loop_pre_header
      _
    $region3: #{cltrf_forward.2} parent=1 // loop_header
      %s15 = sphi 0, %s19
      %p16 = scmp.ge.s32.totalorder %s15, 4
      %s25 = sphi 0, %s27
      %s28 = sphi 0, %s25
      %s29 = sphi 0, %s28
      %s45 = sphi 0, %s29
      %s49 = sphi 0, %s49
      %s51 = sphi 0, %s49
      %s52 = sphi 0, %s51
      %s66 = sphi 0, %s52
      %s70 = sphi 0, %s70
      %s72 = sphi 0, %s70
      %s73 = sphi 0, %s72
      %s87 = sphi 0, %s73
      %s93 = sphi 0, %s95
      %s96 = sphi 0, %s93
      %s97 = sphi 0, %s96
      %s113 = sphi 0, %s97
    $region4: #{cltrf_forward.2} parent=1 // loop_header_branch
      %18 = sbr.rel (%p16) target = $region8
    $region5: #{cltrf_forward.2} parent=1 // loop_body
      %s20 = ssub.s32 %s15, 1
      %s21 = ssub.s32 %s15, 2
      %s22 = sadd.s32 %s15, 1
      %s23 = ssub.s32 %s15, %s22
      %p24 = scmp.eq.s32.totalorder %s23, 0
      %s26 = sadd.s32 %s25, 1
      %s27 = scalar_select %p24, %s25, %s26
      %p30 = pneg %p24
      %p31 = scmp.eq.s32.totalorder %s15, 1
      %p32 = por %p30, %p31
      %p33 = scmp.ne.s32.totalorder %s25, %s28
      %p34 = scmp.eq.s32.totalorder %s15, 0
      %p35 = por %p33, %p34
      %p36 = scmp.ne.s32.totalorder %s25, %s28
      %p37 = scmp.eq.s32.totalorder %s20, 1
      %p38 = por %p36, %p37
      %p39 = scmp.ne.s32.totalorder %s28, %s29
      %p40 = scmp.eq.s32.totalorder %s20, 0
      %p41 = por %p39, %p40
      %p42 = scmp.ne.s32.totalorder %s28, %s29
      %p43 = scmp.eq.s32.totalorder %s21, 1
      %p44 = por %p42, %p43
      %p46 = scmp.ne.s32.totalorder %s29, %s45
      %p47 = scmp.eq.s32.totalorder %s21, 0
      %p48 = por %p46, %p47
      %s50 = sadd.s32 %s49, 1
      %p53 = scmp.eq.s32.totalorder %s15, 1
      %p54 = scmp.ne.s32.totalorder %s49, %s51
      %p55 = scmp.eq.s32.totalorder %s15, 0
      %p56 = por %p54, %p55
      %p57 = scmp.ne.s32.totalorder %s49, %s51
      %p58 = scmp.eq.s32.totalorder %s20, 1
      %p59 = por %p57, %p58
      %p60 = scmp.ne.s32.totalorder %s51, %s52
      %p61 = scmp.eq.s32.totalorder %s20, 0
      %p62 = por %p60, %p61
      %p63 = scmp.ne.s32.totalorder %s51, %s52
      %p64 = scmp.eq.s32.totalorder %s21, 1
      %p65 = por %p63, %p64
      %p67 = scmp.ne.s32.totalorder %s52, %s66
      %p68 = scmp.eq.s32.totalorder %s21, 0
      %p69 = por %p67, %p68
      %s71 = sadd.s32 %s70, 1
      %p74 = scmp.eq.s32.totalorder %s15, 1
      %p75 = scmp.ne.s32.totalorder %s70, %s72
      %p76 = scmp.eq.s32.totalorder %s15, 0
      %p77 = por %p75, %p76
      %p78 = scmp.ne.s32.totalorder %s70, %s72
      %p79 = scmp.eq.s32.totalorder %s20, 1
      %p80 = por %p78, %p79
      %p81 = scmp.ne.s32.totalorder %s72, %s73
      %p82 = scmp.eq.s32.totalorder %s20, 0
      %p83 = por %p81, %p82
      %p84 = scmp.ne.s32.totalorder %s72, %s73
      %p85 = scmp.eq.s32.totalorder %s21, 1
      %p86 = por %p84, %p85
      %p88 = scmp.ne.s32.totalorder %s73, %s87
      %p89 = scmp.eq.s32.totalorder %s21, 0
      %p90 = por %p88, %p89
      %s91 = ssub.s32 %s15, %s22
      %p92 = scmp.eq.s32.totalorder %s91, 0
      %s94 = sadd.s32 %s93, 1
      %s95 = scalar_select %p92, %s93, %s94
      %p98 = pneg %p92
      %p99 = scmp.eq.s32.totalorder %s15, 1
      %p100 = por %p98, %p99
      %p101 = scmp.ne.s32.totalorder %s93, %s96
      %p102 = scmp.eq.s32.totalorder %s15, 0
      %p103 = por %p101, %p102
      %p104 = scmp.ne.s32.totalorder %s93, %s96
      %p105 = scmp.eq.s32.totalorder %s20, 1
      %p106 = por %p104, %p105
      %p107 = scmp.ne.s32.totalorder %s96, %s97
      %p108 = scmp.eq.s32.totalorder %s20, 0
      %p109 = por %p107, %p108
      %p110 = scmp.ne.s32.totalorder %s96, %s97
      %p111 = scmp.eq.s32.totalorder %s21, 1
      %p112 = por %p110, %p111
      %p114 = scmp.ne.s32.totalorder %s97, %s113
      %p115 = scmp.eq.s32.totalorder %s21, 0
      %p116 = por %p114, %p115
      %p117 = scmp.le.s32.totalorder 1, %s15
      %p118 = scmp.lt.s32.totalorder %s15, 3
      %p119 = pnand %p117, %p118
      %p120 = pneg %p119
      // Predicated region
      $region9: #{cltrf_forward.2} parent=5 // pred_check
        _
      $region10: #{cltrf_forward.2} parent=5 // pred_check_branch
        %122 = sbr.rel (%p119) target = $region12
      $region11: #{cltrf_forward.2} parent=5 // pred_region
        %s123 = ssub.s32 %s15, 1
        // Predicated region
        $region13: #{cltrf_forward.2} parent=11 // pred_check
          %p124 = pneg %p62
        $region14: #{cltrf_forward.2} parent=11 // pred_check_branch
          %126 = sbr.rel (%p124) target = $region16
        $region15: #{cltrf_forward.2} parent=11 // pred_region
          _
        $region16: #{cltrf_forward.2} parent=11 // pred_fallthru
          _
        // Predicated region
        $region17: #{cltrf_forward.2} parent=11 // pred_check
          %p127 = pneg %p83
        $region18: #{cltrf_forward.2} parent=11 // pred_check_branch
          %129 = sbr.rel (%p127) target = $region20
        $region19: #{cltrf_forward.2} parent=11 // pred_region
          _
        $region20: #{cltrf_forward.2} parent=11 // pred_fallthru
          _
      $region12: #{cltrf_forward.2} parent=5 // pred_fallthru
        _
      %p130 = scmp.lt.s32.totalorder %s15, 2
      // Predicated region
      $region21: #{cltrf_forward.2} parent=5 // pred_check
        %p131 = pneg %p130
      $region22: #{cltrf_forward.2} parent=5 // pred_check_branch
        %133 = sbr.rel (%p131) target = $region24
      $region23: #{cltrf_forward.2} parent=5 // pred_region
        // Predicated region
        $region25: #{cltrf_forward.2} parent=23 // pred_check
          %p134 = pneg %p35
        $region26: #{cltrf_forward.2} parent=23 // pred_check_branch
          %136 = sbr.rel (%p134) target = $region28
        $region27: #{cltrf_forward.2} parent=23 // pred_region
          %s137 = smul.u32 2, %s15
          %p138 = scmp.lt.s32.totalorder %s137, 3
          %s139 = scalar_select %p138, %s137, 3
          %s140 = smul.addr %s139, 8
          %s141 = scalar_lea.vmem %s3, %s140
          %s142 = smul.u32 2, %s15
        $region28: #{cltrf_forward.2} parent=23 // pred_fallthru
          _
      $region24: #{cltrf_forward.2} parent=5 // pred_fallthru
        _
      %p143 = scmp.le.s32.totalorder 1, %s15
      %p144 = scmp.lt.s32.totalorder %s15, 3
      %p145 = pnand %p143, %p144
      %p146 = pneg %p145
      // Predicated region
      $region29: #{cltrf_forward.2} parent=5 // pred_check
        _
      $region30: #{cltrf_forward.2} parent=5 // pred_check_branch
        %148 = sbr.rel (%p145) target = $region32
      $region31: #{cltrf_forward.2} parent=5 // pred_region
        #allocation14 [shape = 'u8[8192]{0}', space=vmem, size = 0x2000, dematerialized = true, scoped, tag = 'FusionAdapter Buffer %fusion.2 = f32[32,128]{1,0:T(8,128)} fusion(%param_3.1, %param_2.2), kind=kLoop, calls=%fused_computation.3.clone, metadata={op_name="jit(cltrf_forward)/jit(_pad)/pad" stack_frame_id=9}']
        #allocation15 [shape = 'u8[65536]{0}', space=vmem, size = 0x10000, dematerialized = true, scoped, tag = 'FusionAdapter Buffer %fusion.1 = f32[128,32]{1,0:T(8,128)} fusion(%param_1.3, %param_2.2), kind=kLoop, calls=%fused_computation.2.clone, metadata={op_name="jit(cltrf_forward)/jit(_pad)/pad" stack_frame_id=11}']
        %s149 = ssub.s32 %s15, 1
        %s150 = smul.u32 2, %s20
        %p151 = scmp.lt.s32.totalorder %s150, 3
        %s152 = scalar_select %p151, %s150, 3
        %s153 = smul.addr %s152, 8
        %s154 = scalar_lea.vmem %s3, %s153
        %p155 = pneg %p41
        %p156 = pneg %p38
        %p157 = pneg %p62
        %p158 = pneg %p59
        %p159 = pneg %p83
        %p160 = pneg %p80
        %p161 = pneg %p109
        %p162 = pneg %p106
        %s163 = sand.u32 %s96, 1
        %s164 = scalar_lea.sflag [#allocation13], %s163
        %s165 = sand.u32 %s96, 1
        %s166 = smul.addr %s165, 16
        %s167 = scalar_lea.vmem [#allocation12], %s166
        %s168 = smul.u32 2, %s20
        %p169 = scmp.lt.s32.totalorder %s168, 3
        %s170 = scalar_select %p169, %s168, 3
        %s171 = smul.addr %s170, 8
        %s172 = scalar_lea.vmem %s3, %s171
        %s173 = smul.u32 2, %s20
        %s174 = smul.u32 2, %s20
        %v175 = vld [vmem:[%s172] sm:$0xff]
        %v176 = vlaneseq
        %v177 = vand.u32 %v176, 127
        %vm179 = vcmp.lt.s32.totalorder %v177, 48
        %v180 = vsel %vm179, %v175, %v9
        %s182 = ssub.s32 256, 1
        %183 = vst [vmem:[#allocation14] sm:%s182] %v180
        %s184 = scalar_lea.vmem %s172, 8
        %v185 = vld [vmem:[%s184] sm:$0xff]
        %v186 = vlaneseq
        %v187 = vand.u32 %v186, 127
        %vm189 = vcmp.lt.s32.totalorder %v187, 48
        %v190 = vsel %vm189, %v185, %v9
        %s191 = scalar_lea.vmem [#allocation14], 8
        %s193 = ssub.s32 256, 1
        %194 = vst [vmem:[%s191] sm:%s193] %v190
        %v195 = vld [vmem:[%s1] sm:$0xff]
        %v196 = vlaneseq
        %v197 = vand.u32 %v196, 127
        %vm199 = vcmp.lt.s32.totalorder %v197, 32
        %v200 = vsel %vm199, %v195, %v10
        %s202 = ssub.s32 256, 1
        %203 = vst [vmem:[#allocation15] sm:%s202] %v200
        %s204 = scalar_lea.vmem %s1, 8
        %v205 = vld [vmem:[%s204] sm:$0xff]
        %v206 = vlaneseq
        %v207 = vand.u32 %v206, 127
        %vm209 = vcmp.lt.s32.totalorder %v207, 32
        %v210 = vsel %vm209, %v205, %v10
        %s211 = scalar_lea.vmem [#allocation15], 8
        %s213 = ssub.s32 256, 1
        %214 = vst [vmem:[%s211] sm:%s213] %v210
        %s215 = scalar_lea.vmem %s1, 16
        %v216 = vld [vmem:[%s215] sm:$0xff]
        %v217 = vlaneseq
        %v218 = vand.u32 %v217, 127
        %vm220 = vcmp.lt.s32.totalorder %v218, 32
        %v221 = vsel %vm220, %v216, %v10
        %s222 = scalar_lea.vmem [#allocation15], 16
        %s224 = ssub.s32 256, 1
        %225 = vst [vmem:[%s222] sm:%s224] %v221
        %s226 = scalar_lea.vmem %s1, 24
        %v227 = vld [vmem:[%s226] sm:$0xff]
        %v228 = vlaneseq
        %v229 = vand.u32 %v228, 127
        %vm231 = vcmp.lt.s32.totalorder %v229, 32
        %v232 = vsel %vm231, %v227, %v10
        %s233 = scalar_lea.vmem [#allocation15], 24
        %s235 = ssub.s32 256, 1
        %236 = vst [vmem:[%s233] sm:%s235] %v232
        %s237 = scalar_lea.vmem %s1, 32
        %v238 = vld [vmem:[%s237] sm:$0xff]
        %v239 = vlaneseq
        %v240 = vand.u32 %v239, 127
        %vm242 = vcmp.lt.s32.totalorder %v240, 32
        %v243 = vsel %vm242, %v238, %v10
        %s244 = scalar_lea.vmem [#allocation15], 32
        %s246 = ssub.s32 256, 1
        %247 = vst [vmem:[%s244] sm:%s246] %v243
        %s248 = scalar_lea.vmem %s1, 40
        %v249 = vld [vmem:[%s248] sm:$0xff]
        %v250 = vlaneseq
        %v251 = vand.u32 %v250, 127
        %vm253 = vcmp.lt.s32.totalorder %v251, 32
        %v254 = vsel %vm253, %v249, %v10
        %s255 = scalar_lea.vmem [#allocation15], 40
        %s257 = ssub.s32 256, 1
        %258 = vst [vmem:[%s255] sm:%s257] %v254
        %s259 = scalar_lea.vmem [#allocation15], 48
        %s261 = ssub.s32 256, 1
        %262 = vst [vmem:[%s259] sm:%s261] %v10
        %s263 = scalar_lea.vmem [#allocation15], 56
        %s265 = ssub.s32 256, 1
        %266 = vst [vmem:[%s263] sm:%s265] %v10
        %s267 = scalar_lea.vmem [#allocation15], 64
        %s269 = ssub.s32 256, 1
        %270 = vst [vmem:[%s267] sm:%s269] %v10
        %s271 = scalar_lea.vmem [#allocation15], 72
        %s273 = ssub.s32 256, 1
        %274 = vst [vmem:[%s271] sm:%s273] %v10
        %s275 = scalar_lea.vmem [#allocation15], 80
        %s277 = ssub.s32 256, 1
        %278 = vst [vmem:[%s275] sm:%s277] %v10
        %s279 = scalar_lea.vmem [#allocation15], 88
        %s281 = ssub.s32 256, 1
        %282 = vst [vmem:[%s279] sm:%s281] %v10
        %s283 = scalar_lea.vmem [#allocation15], 96
        %s285 = ssub.s32 256, 1
        %286 = vst [vmem:[%s283] sm:%s285] %v10
        %s287 = scalar_lea.vmem [#allocation15], 104
        %s289 = ssub.s32 256, 1
        %290 = vst [vmem:[%s287] sm:%s289] %v10
        %s291 = scalar_lea.vmem [#allocation15], 112
        %s293 = ssub.s32 256, 1
        %294 = vst [vmem:[%s291] sm:%s293] %v10
        %s295 = scalar_lea.vmem [#allocation15], 120
        %s297 = ssub.s32 256, 1
        %298 = vst [vmem:[%s295] sm:%s297] %v10
        %v299 = vld [vmem:[#allocation14] sm:$0xff]
        %v300 = vld [vmem:[#allocation14 + $0x8] sm:$0xff]
        %v301 = vld [vmem:[#allocation15] sm:$0xff]
        %v302 = vld [vmem:[#allocation15 + $0x8] sm:$0xff]
        %v303 = vld [vmem:[#allocation15 + $0x10] sm:$0xff]
        %v304 = vld [vmem:[#allocation15 + $0x18] sm:$0xff]
        %v305 = vld [vmem:[#allocation15 + $0x20] sm:$0xff]
        %v306 = vld [vmem:[#allocation15 + $0x28] sm:$0xff]
        %v307 = vld [vmem:[#allocation15 + $0x30] sm:$0xff]
        %v308 = vld [vmem:[#allocation15 + $0x38] sm:$0xff]
        %v309 = vld [vmem:[#allocation15 + $0x40] sm:$0xff]
        %v310 = vld [vmem:[#allocation15 + $0x48] sm:$0xff]
        %v311 = vld [vmem:[#allocation15 + $0x50] sm:$0xff]
        %v312 = vld [vmem:[#allocation15 + $0x58] sm:$0xff]
        %v313 = vld [vmem:[#allocation15 + $0x60] sm:$0xff]
        %v314 = vld [vmem:[#allocation15 + $0x68] sm:$0xff]
        %v315 = vld [vmem:[#allocation15 + $0x70] sm:$0xff]
        %v316 = vld [vmem:[#allocation15 + $0x78] sm:$0xff]
        %v317 = vld [vmem:[%s0] sm:$0x1]
        %v318 = vperm.slane %v317, 0
        %319 = vmatpush.msra.mxu0 %v316
        %320 = vmatpush.msra.mxu0 %v315
        %321 = vmatpush.msra.mxu0 %v314
        %322 = vmatpush.msra.mxu0 %v313
        %323 = vmatpush.msra.mxu0 %v312
        %324 = vmatpush.msra.mxu0 %v311
        %325 = vmatpush.msra.mxu0 %v310
        %326 = vmatpush.msra.mxu0 %v309
        %327 = vmatpush.msra.mxu0 %v308
        %328 = vmatpush.msra.mxu0 %v307
        %329 = vmatpush.msra.mxu0 %v306
        %330 = vmatpush.msra.mxu0 %v305
        %331 = vmatpush.msra.mxu0 %v304
        %332 = vmatpush.msra.mxu0 %v303
        %333 = vmatpush.msra.mxu0 %v302
        %334 = vmatpush.msra.mxu0 %v301
        %335 = vmatmul.f32.gmra.mxu0 %v299
        %v336 = vpop.f32.mrf.mxu0
        %v337 = vadd.f32 %v318, %v336
        %338 = vmatmul.f32.gmra.mxu0 %v300
        %v339 = vpop.f32.mrf.mxu0
        %v340 = vadd.f32 %v318, %v339
        %341 = vdwg.mxu0
        %vm342 = vcmask 261120
        %v343 = vsel %vm342, %v337, 0.0
        %344 = vadd.xlane.f32.xlu0 %v343
        %v345 = vpop.xlane.xlu0 %344
        %v346 = vsel %vm342, %v340, 0.0
        %347 = vadd.xlane.f32.xlu0 %v346
        %v348 = vpop.xlane.xlu0 %347
        %v349 = vmul.f32 %v345, 0.03125
        %v350 = vmul.f32 %v348, 0.03125
        %v351 = vmul.f32 %v337, %v337
        %v352 = vmul.f32 %v340, %v340
        %v353 = vsel %vm342, %v351, 0.0
        %354 = vadd.xlane.f32.xlu0 %v353
        %v355 = vpop.xlane.xlu0 %354
        %v356 = vsel %vm342, %v352, 0.0
        %357 = vadd.xlane.f32.xlu0 %v356
        %v358 = vpop.xlane.xlu0 %357
        %v359 = vmul.f32 %v355, 0.03125
        %v360 = vmul.f32 %v358, 0.03125
        %v361 = vmul.f32 %v349, %v349
        %v362 = vmul.f32 %v350, %v350
        %v363 = vsub.f32 %v359, %v361
        %v364 = vsub.f32 %v360, %v362
        %v365 = vmax.f32 %v363, 0.0
        %v366 = vmax.f32 %v364, 0.0
        %v367 = vadd.f32 %v365, 1e-05
        %v368 = vadd.f32 %v366, 1e-05
        %v369 = vrsqrt.pop %v367
        %v370 = vmul.f32 %v369, %v367
        %v371 = vmul.f32 %v370, %v369
        %v372 = vmul.f32 0.5, %v371
        %v373 = vsub.f32 1.5, %v372
        %v374 = vmul.f32 %v369, %v373
        %vm375 = vweird.f32 %v367
        %vm376 = vweird.f32 %v369
        %vm377 = vmor %vm375, %vm376
        %v378 = vsel %vm377, %v369, %v374
        %v379 = vrsqrt.pop %v368
        %v380 = vmul.f32 %v379, %v368
        %v381 = vmul.f32 %v380, %v379
        %v382 = vmul.f32 0.5, %v381
        %v383 = vsub.f32 1.5, %v382
        %v384 = vmul.f32 %v379, %v383
        %vm385 = vweird.f32 %v368
        %vm386 = vweird.f32 %v379
        %vm387 = vmor %vm385, %vm386
        %v388 = vsel %vm387, %v379, %v384
        %v389 = vsub.f32 %v337, %v349
        %v390 = vsub.f32 %v340, %v350
        %v391 = vmul.f32 %v389, %v378
        %v392 = vmul.f32 %v390, %v388
        %v393 = vld [vmem:[%s0 + $0x1] sm:$0x1]
        %v394 = vperm.slane %v393, 0
        %v395 = vmul.f32 %v391, %v394
        %v396 = vmul.f32 %v392, %v394
        %v397 = vld [vmem:[%s0 + $0x2] sm:$0x1]
        %v398 = vperm.slane %v397, 0
        %v399 = vadd.f32 %v395, %v398
        %v400 = vadd.f32 %v396, %v398
        %401 = vst.msk [vmem:[%s167] sm:$0xff] %vm342, %v399
        %402 = vst.msk [vmem:[%s167 + $0x8] sm:$0xff] %vm342, %v400
        %s403 = sand.u32 %s96, 1
        %s404 = scalar_lea.sflag [#allocation13], %s403
        %s405 = sand.u32 %s96, 1
        %s406 = smul.addr %s405, 16
        %s407 = scalar_lea.vmem [#allocation12], %s406
        // Predicated region
        $region33: #{cltrf_forward.2} parent=31 // pred_check
          %p408 = pneg %p106
        $region34: #{cltrf_forward.2} parent=31 // pred_check_branch
          %410 = sbr.rel (%p408) target = $region36
        $region35: #{cltrf_forward.2} parent=31 // pred_region
          %s411 = smul.u32 2, %s20
          %413 = vsyncadd %s404, 0
          %s414 = smul.addr %s411, 8
          %s415 = scalar_lea.hbm %s4, %s414
          %s416 = sshll.u32 %s407, 4
          %s417 = int_to_ptr.vmem [resolvable:$true] %s416
          %s418 = sshll.u32 %s415, 4
          %s419 = int_to_ptr.hbm [resolvable:$true] %s418
          %424 = dma.vmem_to_hbm [thread:$0]  %s417, 256, %s419, %s404, 128, 128, 8
        $region36: #{cltrf_forward.2} parent=31 // pred_fallthru
          _
      $region32: #{cltrf_forward.2} parent=5 // pred_fallthru
        _
      %p425 = scmp.le.s32.totalorder 2, %s15
      // Predicated region
      $region37: #{cltrf_forward.2} parent=5 // pred_check
        %p426 = pneg %p425
      $region38: #{cltrf_forward.2} parent=5 // pred_check_branch
        %428 = sbr.rel (%p426) target = $region40
      $region39: #{cltrf_forward.2} parent=5 // pred_region
        %s429 = ssub.s32 %s15, 2
        // Predicated region
        $region41: #{cltrf_forward.2} parent=39 // pred_check
          %p430 = pneg %p112
        $region42: #{cltrf_forward.2} parent=39 // pred_check_branch
          %432 = sbr.rel (%p430) target = $region44
        $region43: #{cltrf_forward.2} parent=39 // pred_region
          %s433 = sand.u32 %s97, 1
          %s434 = scalar_lea.sflag [#allocation13], %s433
          %s435 = sand.u32 %s97, 1
          %s436 = smul.addr %s435, 16
          %s437 = scalar_lea.vmem [#allocation12], %s436
          %439 = dma.done %s434, 256
        $region44: #{cltrf_forward.2} parent=39 // pred_fallthru
          _
      $region40: #{cltrf_forward.2} parent=5 // pred_fallthru
        _
    $region6: #{cltrf_forward.2} parent=1 // loop_footer
      %s19 = sadd.s32 1, %s15
    $region7: #{cltrf_forward.2} parent=1 // loop_footer_branch
      %14 = sbr.rel target = $region3
    $region8: #{cltrf_forward.2} parent=1 // loop_exit
      _
    %440 = vsyncpa [#allocation13], 1
    %s441 = scalar_lea.sflag [#allocation13], 1
    %442 = vsyncpa %s441, 1

</llo_original>
